<compile_context>
chip_gen: v6e
topology: v6e:2x2x1
jax: 0.10.0
libtpu: 0.0.40
codegen_flags: <defaults>
</compile_context>

<pallas_src>
import jax
import jax.numpy as jnp
from jax import lax
from jax.experimental import pallas as pl
from jax.experimental.pallas import tpu as pltpu


def _grid_sample_kernel(idx_ref, w_ref, feat_ref, out_ref):
    """One (q_tile, k_tile) step of the gather-as-matmul grid_sample.

    idx_ref : (4, q_tile) int32   flat H*W corner indices, -1 if out of bounds
    w_ref   : (4, q_tile) float32 bilinear corner weights
    feat_ref: (BC, k_tile) float32 band of the flattened feature map
    out_ref : (BC, q_tile) float32 resident accumulator across the k axis
    """
    k = pl.program_id(1)
    k_tile = feat_ref.shape[1]
    q_tile = idx_ref.shape[1]

    @pl.when(k == 0)
    def _():
        out_ref[...] = jnp.zeros_like(out_ref)

    # Shift corner indices into band-local coordinates (cheap: (4, q_tile)).
    # OOB corners are -1 -> become even more negative -> never match the iota.
    idx_local = idx_ref[...] - k * k_tile            # (4, q_tile) int32
    w = w_ref[...]                                   # (4, q_tile) f32

    hw_iota = lax.broadcasted_iota(jnp.int32, (k_tile, q_tile), 0)

    # Sparse (<=4 nonzeros per column) transposed sampling matrix, built on the
    # VPU with compare + select per corner.
    s_t = jnp.where(hw_iota == idx_local[0:1, :], w[0:1, :], 0.0)
    for c in range(1, 4):
        s_t = s_t + jnp.where(hw_iota == idx_local[c:c + 1, :], w[c:c + 1, :], 0.0)

    # Gather-as-matmul on the MXU: (BC, k_tile) @ (k_tile, q_tile) -> (BC, q_tile)
    out_ref[...] += jnp.dot(feat_ref[...], s_t,
                            preferred_element_type=jnp.float32)


def _precompute_bilinear_tables(patches_2d, H, W):
    """Host-side (cacheable) precompute of bilinear corner indices & weights.

    patches_2d: (N, Hp, Wp, 2) normalized (x, y) in [-1, 1]
    Returns idx (4, Q) int32 (flat y*W+x, -1 if OOB) and wts (4, Q) float32.
    grid_sample semantics: bilinear, align_corners=True, padding_mode='zeros'.
    """
    grid = patches_2d.reshape(-1, 2).astype(jnp.float32)   # (Q, 2)
    fx = (grid[:, 0] + 1.0) * 0.5 * (W - 1)
    fy = (grid[:, 1] + 1.0) * 0.5 * (H - 1)
    x0f = jnp.floor(fx)
    y0f = jnp.floor(fy)
    x0 = x0f.astype(jnp.int32)
    y0 = y0f.astype(jnp.int32)
    x1 = x0 + 1
    y1 = y0 + 1
    wx1 = fx - x0f
    wx0 = 1.0 - wx1
    wy1 = fy - y0f
    wy0 = 1.0 - wy1

    def corner(yi, xi, w):
        valid = (xi >= 0) & (xi < W) & (yi >= 0) & (yi < H)
        idx = jnp.where(valid, yi * W + xi, -1)      # -1 sentinel = zeros padding
        return idx.astype(jnp.int32), w.astype(jnp.float32)

    i00, w00 = corner(y0, x0, wy0 * wx0)
    i01, w01 = corner(y0, x1, wy0 * wx1)
    i10, w10 = corner(y1, x0, wy1 * wx0)
    i11, w11 = corner(y1, x1, wy1 * wx1)

    idx = jnp.stack([i00, i01, i10, i11], axis=0)    # (4, Q)
    wts = jnp.stack([w00, w01, w10, w11], axis=0)    # (4, Q)
    return idx, wts


def fisheye2sphere_forward(x, patches_2d, *, q_tile=256, k_tile=128):
    """x: (B, C, H, W) float32; patches_2d: (N, Hp, Wp, 2) float32 in [-1, 1].

    Returns (B, N, C, Hp, Wp) float32, matching the PyTorch module's forward.
    q_tile: sample-point tile (lane axis of the output).  256 suits v6e/v7x's
            256-wide MXU; 128 is fine on v5e.
    k_tile: H*W contraction band per grid step (bounds VMEM & one-hot width).
    """
    B, C, H, W = x.shape
    N, Hp, Wp, two = patches_2d.shape
    assert two == 2
    Q = N * Hp * Wp
    BC = B * C
    HW = H * W

    q_tile = min(q_tile, Q)
    k_tile = min(k_tile, HW)
    assert Q % q_tile == 0, "q_tile must divide N*Hp*Wp"
    assert HW % k_tile == 0, "k_tile must divide H*W"
    assert q_tile % 128 == 0 or q_tile == Q
    assert k_tile % 128 == 0 or k_tile == HW

    # Zero-copy flatten of NCHW; no transpose pass over HBM.
    feat = x.reshape(BC, HW).astype(jnp.float32)

    # patches_2d is a fixed module parameter: in a real module these tables
    # would be computed once at __init__ and cached.
    idx, wts = _precompute_bilinear_tables(patches_2d, H, W)   # (4, Q) each

    # TODO(synk): for real fisheye image sizes, use scalar prefetch to deliver
    # only the per-patch row band of `feat` (patch spatial locality) instead of
    # sweeping all H*W bands.
    out_flat = pl.pallas_call(
        _grid_sample_kernel,
        out_shape=jax.ShapeDtypeStruct((BC, Q), jnp.float32),
        grid_spec=pltpu.PrefetchScalarGridSpec(
            num_scalar_prefetch=0,
            grid=(Q // q_tile, HW // k_tile),        # reduction axis last
            in_specs=[
                pl.BlockSpec((4, q_tile), lambda i, k: (0, i)),    # corner idx
                pl.BlockSpec((4, q_tile), lambda i, k: (0, i)),    # corner wts
                pl.BlockSpec((BC, k_tile), lambda i, k: (0, k)),   # feature band
            ],
            out_specs=pl.BlockSpec((BC, q_tile), lambda i, k: (0, i)),
        ),
        compiler_params=pltpu.CompilerParams(
            dimension_semantics=("parallel", "arbitrary"),
        ),
    )(idx, wts, feat)

    # (BC, Q) -> (B, C, N, Hp, Wp) -> (B, N, C, Hp, Wp)
    out = out_flat.reshape(B, C, N, Hp, Wp)
    return jnp.transpose(out, (0, 2, 1, 3, 4))


def _reference_forward(x, patches_2d):
    """Pure-JAX reference of torch.nn.functional.grid_sample semantics
    (bilinear, align_corners=True, padding_mode='zeros')."""
    B, C, H, W = x.shape
    N, Hp, Wp, _ = patches_2d.shape
    feat = x.reshape(B * C, H, W)
    grid = patches_2d.reshape(-1, 2)
    fx = (grid[:, 0] + 1.0) * 0.5 * (W - 1)
    fy = (grid[:, 1] + 1.0) * 0.5 * (H - 1)
    x0 = jnp.floor(fx).astype(jnp.int32)
    y0 = jnp.floor(fy).astype(jnp.int32)
    x1, y1 = x0 + 1, y0 + 1
    wx1 = fx - x0
    wx0 = 1.0 - wx1
    wy1 = fy - y0
    wy0 = 1.0 - wy1

    def gather(yi, xi):
        valid = (xi >= 0) & (xi < W) & (yi >= 0) & (yi < H)
        xc = jnp.clip(xi, 0, W - 1)
        yc = jnp.clip(yi, 0, H - 1)
        v = feat[:, yc, xc]                     # (B*C, Q)
        return jnp.where(valid[None, :], v, 0.0)

    out = (gather(y0, x0) * (wy0 * wx0)[None]
           + gather(y0, x1) * (wy0 * wx1)[None]
           + gather(y1, x0) * (wy1 * wx0)[None]
           + gather(y1, x1) * (wy1 * wx1)[None])   # (B*C, Q)
    out = out.reshape(B, C, N, Hp, Wp)
    return jnp.transpose(out, (0, 2, 1, 3, 4))


if __name__ == "__main__":
    # Small shapes consistent with the module's forward:
    #   input feature map (B, C, H, W), sampling patches (N, Hp, Wp, 2)
    B, C, H, W = 2, 4, 16, 16
    N, Hp, Wp = 8, 8, 8

    key = jax.random.PRNGKey(0)
    kx, kg = jax.random.split(key)
    x = jax.random.normal(kx, (B, C, H, W), dtype=jnp.float32)
    # TODO(synk): real patches_2d comes from FishEyeCameraCalibrated projection
    # of spherical patches (needs a calibration file); use deterministic
    # synthetic normalized grid coordinates in [-1, 1] instead.
    patches_2d = jax.random.uniform(
        kg, (N, Hp, Wp, 2), dtype=jnp.float32, minval=-1.0, maxval=1.0)

    out = fisheye2sphere_forward(x, patches_2d, q_tile=256, k_tile=128)
    out = jax.block_until_ready(out)
    assert out.shape == (B, N, C, Hp, Wp), out.shape

    ref = _reference_forward(x, patches_2d)
    assert jnp.allclose(out, ref, atol=1e-4, rtol=1e-4), \
        float(jnp.max(jnp.abs(out - ref)))

    print("KERNEL_OK")
</pallas_src>

<mosaic_0001>
module attributes {stable_mosaic.version = 11 : i64} {
  func.func @_grid_sample_kernel(%arg0: i32, %arg1: i32, %arg2: memref<4x256xi32, #tpu.memory_space<vmem>>, %arg3: memref<4x256xf32, #tpu.memory_space<vmem>>, %arg4: memref<8x128xf32, #tpu.memory_space<vmem>>, %arg5: memref<8x256xf32, #tpu.memory_space<vmem>>) attributes {dimension_semantics = [#tpu.dimension_semantics<parallel>, #tpu.dimension_semantics<arbitrary>], iteration_bounds = array<i64: 2, 2>, scalar_prefetch = 0 : i64, scratch_operands = 0 : i64, tpu.core_type = #tpu.core_type<tc>, window_params = [{transform_indices = @transform_0, window_bounds = array<i64: 4, 256>}, {transform_indices = @transform_1, window_bounds = array<i64: 4, 256>}, {transform_indices = @transform_2, window_bounds = array<i64: 8, 128>}, {transform_indices = @transform_3, window_bounds = array<i64: 8, 256>}]} {
    %c0_i32 = arith.constant 0 : i32
    %0 = arith.cmpi eq, %arg1, %c0_i32 : i32
    %1 = arith.extui %0 : i1 to i32
    %c0_i32_0 = arith.constant 0 : i32
    %2 = arith.cmpi ne, %1, %c0_i32_0 : i32
    scf.if %2 {
      %cst_14 = arith.constant 0.000000e+00 : f32
      %49 = vector.broadcast %cst_14 : f32 to vector<8x256xf32>
      %c0_15 = arith.constant 0 : index
      %c0_16 = arith.constant 0 : index
      %50 = vector.load %arg5[%c0_15, %c0_16] : memref<8x256xf32, #tpu.memory_space<vmem>>, vector<8x256xf32>
      tpu.vector_store %arg5[%c0_15, %c0_16], %49 {strides = array<i32>} : memref<8x256xf32, #tpu.memory_space<vmem>>, vector<8x256xf32>,
    } else {
    }
    %c0 = arith.constant 0 : index
    %c0_1 = arith.constant 0 : index
    %3 = vector.load %arg2[%c0, %c0_1] : memref<4x256xi32, #tpu.memory_space<vmem>>, vector<4x256xi32>
    %c128_i32 = arith.constant 128 : i32
    %4 = arith.muli %arg1, %c128_i32 : i32
    %5 = vector.broadcast %4 : i32 to vector<4x256xi32>
    %6 = arith.subi %3, %5 : vector<4x256xi32>
    %c0_2 = arith.constant 0 : index
    %c0_3 = arith.constant 0 : index
    %7 = vector.load %arg3[%c0_2, %c0_3] : memref<4x256xf32, #tpu.memory_space<vmem>>, vector<4x256xf32>
    %8 = tpu.iota {dimensions = array<i32: 0>} : vector<128x256xi32>
    %9 = vector.extract_strided_slice %6 {offsets = [0, 0], sizes = [1, 256], strides = [1, 1]} : vector<4x256xi32> to vector<1x256xi32>
    %10 = vector.broadcast %9 : vector<1x256xi32> to vector<128x256xi32>
    %11 = arith.cmpi eq, %8, %10 : vector<128x256xi32>
    %12 = vector.extract_strided_slice %7 {offsets = [0, 0], sizes = [1, 256], strides = [1, 1]} : vector<4x256xf32> to vector<1x256xf32>
    %cst = arith.constant 0.000000e+00 : f32
    %13 = vector.shape_cast %12 : vector<1x256xf32> to vector<1x256xf32>
    %14 = vector.broadcast %13 : vector<1x256xf32> to vector<128x256xf32>
    %15 = vector.broadcast %cst : f32 to vector<128x256xf32>
    %16 = arith.select %11, %14, %15 : vector<128x256xi1>, vector<128x256xf32>
    %17 = vector.extract_strided_slice %6 {offsets = [1, 0], sizes = [1, 256], strides = [1, 1]} : vector<4x256xi32> to vector<1x256xi32>
    %18 = vector.broadcast %17 : vector<1x256xi32> to vector<128x256xi32>
    %19 = arith.cmpi eq, %8, %18 : vector<128x256xi32>
    %20 = vector.extract_strided_slice %7 {offsets = [1, 0], sizes = [1, 256], strides = [1, 1]} : vector<4x256xf32> to vector<1x256xf32>
    %cst_4 = arith.constant 0.000000e+00 : f32
    %21 = vector.shape_cast %20 : vector<1x256xf32> to vector<1x256xf32>
    %22 = vector.broadcast %21 : vector<1x256xf32> to vector<128x256xf32>
    %23 = vector.broadcast %cst_4 : f32 to vector<128x256xf32>
    %24 = arith.select %19, %22, %23 : vector<128x256xi1>, vector<128x256xf32>
    %25 = arith.addf %16, %24 : vector<128x256xf32>
    %26 = vector.extract_strided_slice %6 {offsets = [2, 0], sizes = [1, 256], strides = [1, 1]} : vector<4x256xi32> to vector<1x256xi32>
    %27 = vector.broadcast %26 : vector<1x256xi32> to vector<128x256xi32>
    %28 = arith.cmpi eq, %8, %27 : vector<128x256xi32>
    %29 = vector.extract_strided_slice %7 {offsets = [2, 0], sizes = [1, 256], strides = [1, 1]} : vector<4x256xf32> to vector<1x256xf32>
    %cst_5 = arith.constant 0.000000e+00 : f32
    %30 = vector.shape_cast %29 : vector<1x256xf32> to vector<1x256xf32>
    %31 = vector.broadcast %30 : vector<1x256xf32> to vector<128x256xf32>
    %32 = vector.broadcast %cst_5 : f32 to vector<128x256xf32>
    %33 = arith.select %28, %31, %32 : vector<128x256xi1>, vector<128x256xf32>
    %34 = arith.addf %25, %33 : vector<128x256xf32>
    %35 = vector.extract_strided_slice %6 {offsets = [3, 0], sizes = [1, 256], strides = [1, 1]} : vector<4x256xi32> to vector<1x256xi32>
    %36 = vector.broadcast %35 : vector<1x256xi32> to vector<128x256xi32>
    %37 = arith.cmpi eq, %8, %36 : vector<128x256xi32>
    %38 = vector.extract_strided_slice %7 {offsets = [3, 0], sizes = [1, 256], strides = [1, 1]} : vector<4x256xf32> to vector<1x256xf32>
    %cst_6 = arith.constant 0.000000e+00 : f32
    %39 = vector.shape_cast %38 : vector<1x256xf32> to vector<1x256xf32>
    %40 = vector.broadcast %39 : vector<1x256xf32> to vector<128x256xf32>
    %41 = vector.broadcast %cst_6 : f32 to vector<128x256xf32>
    %42 = arith.select %37, %40, %41 : vector<128x256xi1>, vector<128x256xf32>
    %43 = arith.addf %34, %42 : vector<128x256xf32>
    %c0_7 = arith.constant 0 : index
    %c0_8 = arith.constant 0 : index
    %44 = vector.load %arg5[%c0_7, %c0_8] : memref<8x256xf32, #tpu.memory_space<vmem>>, vector<8x256xf32>
    %c0_9 = arith.constant 0 : index
    %c0_10 = arith.constant 0 : index
    %45 = vector.load %arg4[%c0_9, %c0_10] : memref<8x128xf32, #tpu.memory_space<vmem>>, vector<8x128xf32>
    %cst_11 = arith.constant dense<0.000000e+00> : vector<8x256xf32>
    %46 = tpu.matmul %45, %43, %cst_11 {dimension_numbers = #tpu.dot_dimension_numbers<[1], [0], [0], [1], [0, 0, 1, 1], [], []>} : vector<8x128xf32>, vector<128x256xf32>, vector<8x256xf32> -> vector<8x256xf32>
    %47 = arith.addf %44, %46 : vector<8x256xf32>
    %c0_12 = arith.constant 0 : index
    %c0_13 = arith.constant 0 : index
    %48 = vector.load %arg5[%c0_12, %c0_13] : memref<8x256xf32, #tpu.memory_space<vmem>>, vector<8x256xf32>
    tpu.vector_store %arg5[%c0_12, %c0_13], %47 {strides = array<i32>} : memref<8x256xf32, #tpu.memory_space<vmem>>, vector<8x256xf32>,
    return
  }
  func.func @transform_0(%arg0: i32, %arg1: i32) -> (i32, i32) {
    %c0_i32 = arith.constant 0 : i32
    %c0_i32_0 = arith.constant 0 : i32
    return %c0_i32, %arg0 : i32, i32
  }
  func.func @transform_1(%arg0: i32, %arg1: i32) -> (i32, i32) {
    %c0_i32 = arith.constant 0 : i32
    %c0_i32_0 = arith.constant 0 : i32
    return %c0_i32, %arg0 : i32, i32
  }
  func.func @transform_2(%arg0: i32, %arg1: i32) -> (i32, i32) {
    %c0_i32 = arith.constant 0 : i32
    %c0_i32_0 = arith.constant 0 : i32
    return %c0_i32, %arg1 : i32, i32
  }
  func.func @transform_3(%arg0: i32, %arg1: i32) -> (i32, i32) {
    %c0_i32 = arith.constant 0 : i32
    %c0_i32_0 = arith.constant 0 : i32
    return %c0_i32, %arg0 : i32, i32
  }
}

</mosaic_0001>

<llo_original>
// kernel: tpu_custom_call.1
$region0: #{tpu_custom_call.1}
  #allocation0 [shape = 'u32[]', space=smem, size = 0x4, offset = 0x4, fixed_abs, tag = 'smem constant byte address 0x4 - core index']
  #allocation1 [shape = 'u32[144,128]{1,0:T(1,128)}', space=vmem, size = 0x12000, scoped, tag = 'internal scratch']
  %s0 = inlined_call_operand.hbm [shape: s32[4,512], index: 0, kind: input, shape index: {}]
  %s1 = inlined_call_operand.hbm [shape: f32[4,512], index: 1, kind: input, shape index: {}]
  %s2 = inlined_call_operand.hbm [shape: f32[8,256], index: 2, kind: input, shape index: {}]
  %s3 = inlined_call_operand.hbm [shape: f32[8,512], index: 3, kind: output, shape index: {}]
  %s4 = sld [smem:[#allocation0]]
  $region61: #{tpu_custom_call.1} parent=0
    _
  %s6 = ssub.s32 1, %s4
  %s7 = scalar_select 0, %s6, %s4
  $region1: #{tpu_custom_call.1} parent=0
    #allocation2 [shape = 'u8[8192]{0}', space=vmem, size = 0x2000, scoped, tag = 'input window, operand 0']
    #allocation3 [shape = 's32[2]{0}', space=sflag, size = 0x8, scoped, tag = 'scoped memory for tpu_custom_call.1']
    #allocation4 [shape = 's32[2]{0}', space=sflag, size = 0x8, scoped, tag = 'scoped memory for tpu_custom_call.1']
    #allocation5 [shape = 'u8[8192]{0}', space=vmem, size = 0x2000, scoped, tag = 'input window, operand 1']
    #allocation6 [shape = 's32[2]{0}', space=sflag, size = 0x8, scoped, tag = 'scoped memory for tpu_custom_call.1']
    #allocation7 [shape = 'u8[8192]{0}', space=vmem, size = 0x2000, scoped, tag = 'input window, operand 2']
    #allocation8 [shape = 'u8[16384]{0}', space=vmem, size = 0x4000, scoped, tag = 'output window, operand 0']
    %8 = vsyncpa [#allocation3], 0
    %s9 = scalar_lea.sflag [#allocation3], 1
    %10 = vsyncpa %s9, 0
    %11 = vsyncpa [#allocation6], 0
    %s12 = scalar_lea.sflag [#allocation6], 1
    %13 = vsyncpa %s12, 0
    %14 = vsyncpa [#allocation4], 0
    %s15 = scalar_lea.sflag [#allocation4], 1
    %16 = vsyncpa %s15, 0
    loop: start=0, step=1, limit=6
    $region2: #{tpu_custom_call.1} parent=1 // loop_pre_header
      _
    $region3: #{tpu_custom_call.1} parent=1 // loop_header
      %s18 = sphi 0, %s22
      %p19 = scmp.ge.s32.totalorder %s18, 6
      %s25 = sphi 0, %s37
      %s26 = sphi 0, %s33
      %s27 = sphi 0, %s25
      %s28 = sphi 0, %s26
      %s29 = sphi 0, %s27
      %s30 = sphi 0, %s28
      %s40 = sphi 0, %s42
      %s43 = sphi 0, %s40
      %s44 = sphi 0, %s43
      %s60 = sphi 0, %s44
      %s66 = sphi 0, %s68
      %s69 = sphi 0, %s66
      %s70 = sphi 0, %s69
      %s86 = sphi 0, %s70
      %s92 = sphi 0, %s94
      %s95 = sphi 0, %s92
      %s96 = sphi 0, %s95
      %s112 = sphi 0, %s96
      %s118 = sphi 0, %s120
      %s121 = sphi 0, %s118
      %s122 = sphi 0, %s121
      %s138 = sphi 0, %s122
    $region4: #{tpu_custom_call.1} parent=1 // loop_header_branch
      %21 = sbr.rel (%p19) target = $region8
    $region5: #{tpu_custom_call.1} parent=1 // loop_body
      %s23 = ssub.s32 %s18, 1
      %s24 = ssub.s32 %s18, 2
      %s31 = sadd.s32 1, %s26
      %p32 = scmp.ge.s32.totalorder %s31, 2
      %s33 = scalar_select %p32, 0, %s31
      %s34 = sadd.s32 1, %s25
      %s35 = scalar_select %p32, %s34, %s25
      %p36 = scmp.ge.s32.totalorder %s35, 2
      %s37 = scalar_select %p36, 0, %s35
      %s38 = ssub.s32 %s25, %s37
      %p39 = scmp.eq.s32.totalorder %s38, 0
      %s41 = sadd.s32 %s40, 1
      %s42 = scalar_select %p39, %s40, %s41
      %p45 = pneg %p39
      %p46 = scmp.eq.s32.totalorder %s18, 3
      %p47 = por %p45, %p46
      %p48 = scmp.ne.s32.totalorder %s40, %s43
      %p49 = scmp.eq.s32.totalorder %s18, 0
      %p50 = por %p48, %p49
      %p51 = scmp.ne.s32.totalorder %s40, %s43
      %p52 = scmp.eq.s32.totalorder %s23, 3
      %p53 = por %p51, %p52
      %p54 = scmp.ne.s32.totalorder %s43, %s44
      %p55 = scmp.eq.s32.totalorder %s23, 0
      %p56 = por %p54, %p55
      %p57 = scmp.ne.s32.totalorder %s43, %s44
      %p58 = scmp.eq.s32.totalorder %s24, 3
      %p59 = por %p57, %p58
      %p61 = scmp.ne.s32.totalorder %s44, %s60
      %p62 = scmp.eq.s32.totalorder %s24, 0
      %p63 = por %p61, %p62
      %s64 = ssub.s32 %s25, %s37
      %p65 = scmp.eq.s32.totalorder %s64, 0
      %s67 = sadd.s32 %s66, 1
      %s68 = scalar_select %p65, %s66, %s67
      %p71 = pneg %p65
      %p72 = scmp.eq.s32.totalorder %s18, 3
      %p73 = por %p71, %p72
      %p74 = scmp.ne.s32.totalorder %s66, %s69
      %p75 = scmp.eq.s32.totalorder %s18, 0
      %p76 = por %p74, %p75
      %p77 = scmp.ne.s32.totalorder %s66, %s69
      %p78 = scmp.eq.s32.totalorder %s23, 3
      %p79 = por %p77, %p78
      %p80 = scmp.ne.s32.totalorder %s69, %s70
      %p81 = scmp.eq.s32.totalorder %s23, 0
      %p82 = por %p80, %p81
      %p83 = scmp.ne.s32.totalorder %s69, %s70
      %p84 = scmp.eq.s32.totalorder %s24, 3
      %p85 = por %p83, %p84
      %p87 = scmp.ne.s32.totalorder %s70, %s86
      %p88 = scmp.eq.s32.totalorder %s24, 0
      %p89 = por %p87, %p88
      %s90 = ssub.s32 %s26, %s33
      %p91 = scmp.eq.s32.totalorder %s90, 0
      %s93 = sadd.s32 %s92, 1
      %s94 = scalar_select %p91, %s92, %s93
      %p97 = pneg %p91
      %p98 = scmp.eq.s32.totalorder %s18, 3
      %p99 = por %p97, %p98
      %p100 = scmp.ne.s32.totalorder %s92, %s95
      %p101 = scmp.eq.s32.totalorder %s18, 0
      %p102 = por %p100, %p101
      %p103 = scmp.ne.s32.totalorder %s92, %s95
      %p104 = scmp.eq.s32.totalorder %s23, 3
      %p105 = por %p103, %p104
      %p106 = scmp.ne.s32.totalorder %s95, %s96
      %p107 = scmp.eq.s32.totalorder %s23, 0
      %p108 = por %p106, %p107
      %p109 = scmp.ne.s32.totalorder %s95, %s96
      %p110 = scmp.eq.s32.totalorder %s24, 3
      %p111 = por %p109, %p110
      %p113 = scmp.ne.s32.totalorder %s96, %s112
      %p114 = scmp.eq.s32.totalorder %s24, 0
      %p115 = por %p113, %p114
      %s116 = ssub.s32 %s25, %s37
      %p117 = scmp.eq.s32.totalorder %s116, 0
      %s119 = sadd.s32 %s118, 1
      %s120 = scalar_select %p117, %s118, %s119
      %p123 = pneg %p117
      %p124 = scmp.eq.s32.totalorder %s18, 3
      %p125 = por %p123, %p124
      %p126 = scmp.ne.s32.totalorder %s118, %s121
      %p127 = scmp.eq.s32.totalorder %s18, 0
      %p128 = por %p126, %p127
      %p129 = scmp.ne.s32.totalorder %s118, %s121
      %p130 = scmp.eq.s32.totalorder %s23, 3
      %p131 = por %p129, %p130
      %p132 = scmp.ne.s32.totalorder %s121, %s122
      %p133 = scmp.eq.s32.totalorder %s23, 0
      %p134 = por %p132, %p133
      %p135 = scmp.ne.s32.totalorder %s121, %s122
      %p136 = scmp.eq.s32.totalorder %s24, 3
      %p137 = por %p135, %p136
      %p139 = scmp.ne.s32.totalorder %s122, %s138
      %p140 = scmp.eq.s32.totalorder %s24, 0
      %p141 = por %p139, %p140
      %p142 = scmp.le.s32.totalorder 1, %s18
      %p143 = scmp.lt.s32.totalorder %s18, 5
      %p144 = pnand %p142, %p143
      %p145 = pneg %p144
      // Predicated region
      $region9: #{tpu_custom_call.1} parent=5 // pred_check
        _
      $region10: #{tpu_custom_call.1} parent=5 // pred_check_branch
        %147 = sbr.rel (%p144) target = $region12
      $region11: #{tpu_custom_call.1} parent=5 // pred_region
        %s148 = ssub.s32 %s18, 1
      $region12: #{tpu_custom_call.1} parent=5 // pred_fallthru
        _
      %p149 = scmp.lt.s32.totalorder %s18, 4
      // Predicated region
      $region13: #{tpu_custom_call.1} parent=5 // pred_check
        %p150 = pneg %p149
      $region14: #{tpu_custom_call.1} parent=5 // pred_check_branch
        %152 = sbr.rel (%p150) target = $region16
      $region15: #{tpu_custom_call.1} parent=5 // pred_region
        // Predicated region
        $region17: #{tpu_custom_call.1} parent=15 // pred_check
          %p153 = pneg %p50
        $region18: #{tpu_custom_call.1} parent=15 // pred_check_branch
          %155 = sbr.rel (%p153) target = $region20
        $region19: #{tpu_custom_call.1} parent=15 // pred_region
          %s156 = sand.u32 %s40, 1
          %s157 = scalar_lea.sflag [#allocation3], %s156
          %s158 = sand.u32 %s40, 1
          %s159 = smul.addr %s158, 8
          %s160 = scalar_lea.vmem [#allocation2], %s159
          %s161 = smul.u32 2, %s25
          %s163 = ssub.s32 128, 128
          %164 = vsyncadd %s157, %s163
          %s165 = smul.addr %s161, 64
          %s166 = scalar_lea.hbm %s0, %s165
          %s168 = sshll.u32 %s160, 4
          %s169 = int_to_ptr.vmem [resolvable:$true] %s168
          %171 = dma.hbm_to_vmem [thread:$0]  %s166, 128, %s169, %s157
        $region20: #{tpu_custom_call.1} parent=15 // pred_fallthru
          _
        // Predicated region
        $region21: #{tpu_custom_call.1} parent=15 // pred_check
          %p172 = pneg %p76
        $region22: #{tpu_custom_call.1} parent=15 // pred_check_branch
          %174 = sbr.rel (%p172) target = $region24
        $region23: #{tpu_custom_call.1} parent=15 // pred_region
          %s175 = sand.u32 %s18, 1
          %s176 = scalar_lea.sflag [#allocation6], %s175
          %s177 = sand.u32 %s66, 1
          %s178 = smul.addr %s177, 8
          %s179 = scalar_lea.vmem [#allocation5], %s178
          %s180 = smul.u32 2, %s25
          %s182 = ssub.s32 128, 128
          %183 = vsyncadd %s176, %s182
          %s184 = smul.addr %s180, 64
          %s185 = scalar_lea.hbm %s1, %s184
          %s187 = sshll.u32 %s179, 4
          %s188 = int_to_ptr.vmem [resolvable:$true] %s187
          %190 = dma.hbm_to_vmem [thread:$0]  %s185, 128, %s188, %s176
        $region24: #{tpu_custom_call.1} parent=15 // pred_fallthru
          _
        // Predicated region
        $region25: #{tpu_custom_call.1} parent=15 // pred_check
          %p191 = pneg %p102
        $region26: #{tpu_custom_call.1} parent=15 // pred_check_branch
          %193 = sbr.rel (%p191) target = $region28
        $region27: #{tpu_custom_call.1} parent=15 // pred_region
          %s194 = sand.u32 %s18, 1
          %s195 = scalar_lea.sflag [#allocation6], %s194
          %s196 = sand.u32 %s92, 1
          %s197 = smul.addr %s196, 8
          %s198 = scalar_lea.vmem [#allocation7], %s197
          %s200 = ssub.s32 128, 128
          %201 = vsyncadd %s195, %s200
          %s202 = smul.addr %s26, 128
          %s203 = scalar_lea.hbm %s2, %s202
          %s205 = sshll.u32 %s198, 4
          %s206 = int_to_ptr.vmem [resolvable:$true] %s205
          %208 = dma.hbm_to_vmem [thread:$0]  %s203, 128, %s206, %s195
        $region28: #{tpu_custom_call.1} parent=15 // pred_fallthru
          _
      $region16: #{tpu_custom_call.1} parent=5 // pred_fallthru
        _
      %p209 = scmp.le.s32.totalorder 1, %s18
      %p210 = scmp.lt.s32.totalorder %s18, 5
      %p211 = pnand %p209, %p210
      %p212 = pneg %p211
      // Predicated region
      $region29: #{tpu_custom_call.1} parent=5 // pred_check
        _
      $region30: #{tpu_custom_call.1} parent=5 // pred_check_branch
        %214 = sbr.rel (%p211) target = $region32
      $region31: #{tpu_custom_call.1} parent=5 // pred_region
        %s215 = ssub.s32 %s18, 1
        %s216 = sand.u32 %s43, 1
        %s217 = scalar_lea.sflag [#allocation3], %s216
        %s218 = sand.u32 %s43, 1
        %s219 = smul.addr %s218, 8
        %s220 = scalar_lea.vmem [#allocation2], %s219
        // Predicated region
        $region33: #{tpu_custom_call.1} parent=31 // pred_check
          %p221 = pneg %p56
        $region34: #{tpu_custom_call.1} parent=31 // pred_check_branch
          %223 = sbr.rel (%p221) target = $region36
        $region35: #{tpu_custom_call.1} parent=31 // pred_region
          %224 = dma.done %s217, 128
        $region36: #{tpu_custom_call.1} parent=31 // pred_fallthru
          _
        %s225 = sand.u32 %s23, 1
        %s226 = scalar_lea.sflag [#allocation6], %s225
        %s227 = sand.u32 %s69, 1
        %s228 = smul.addr %s227, 8
        %s229 = scalar_lea.vmem [#allocation5], %s228
        // Predicated region
        $region37: #{tpu_custom_call.1} parent=31 // pred_check
          %p230 = pneg %p82
        $region38: #{tpu_custom_call.1} parent=31 // pred_check_branch
          %232 = sbr.rel (%p230) target = $region40
        $region39: #{tpu_custom_call.1} parent=31 // pred_region
          %233 = dma.done %s226, 128
        $region40: #{tpu_custom_call.1} parent=31 // pred_fallthru
          _
        %s234 = sand.u32 %s23, 1
        %s235 = scalar_lea.sflag [#allocation6], %s234
        %s236 = sand.u32 %s95, 1
        %s237 = smul.addr %s236, 8
        %s238 = scalar_lea.vmem [#allocation7], %s237
        // Predicated region
        $region41: #{tpu_custom_call.1} parent=31 // pred_check
          %p239 = pneg %p108
        $region42: #{tpu_custom_call.1} parent=31 // pred_check_branch
          %241 = sbr.rel (%p239) target = $region44
        $region43: #{tpu_custom_call.1} parent=31 // pred_region
          %242 = dma.done %s235, 128
        $region44: #{tpu_custom_call.1} parent=31 // pred_fallthru
          _
        %s243 = sand.u32 %s43, 1
        %s244 = scalar_lea.sflag [#allocation3], %s243
        %s245 = sand.u32 %s43, 1
        %s246 = smul.addr %s245, 8
        %s247 = scalar_lea.vmem [#allocation2], %s246
        %p248 = pneg %p56
        %p249 = pneg %p53
        %s250 = sand.u32 %s23, 1
        %s251 = scalar_lea.sflag [#allocation6], %s250
        %s252 = sand.u32 %s69, 1
        %s253 = smul.addr %s252, 8
        %s254 = scalar_lea.vmem [#allocation5], %s253
        %p255 = pneg %p82
        %p256 = pneg %p79
        %s257 = sand.u32 %s23, 1
        %s258 = scalar_lea.sflag [#allocation6], %s257
        %s259 = sand.u32 %s95, 1
        %s260 = smul.addr %s259, 8
        %s261 = scalar_lea.vmem [#allocation7], %s260
        %p262 = pneg %p108
        %p263 = pneg %p105
        %p264 = pneg %p134
        %p265 = pneg %p131
        %s266 = sand.u32 %s121, 1
        %s267 = scalar_lea.sflag [#allocation4], %s266
        %s268 = sand.u32 %s121, 1
        %s269 = smul.addr %s268, 16
        %s270 = scalar_lea.vmem [#allocation8], %s269
        %s271 = smul.u32 2, %s27
        %s272 = smul.u32 2, %s27
        %s273 = smul.u32 2, %s27
        %p274 = scmp.eq.s32.totalorder %s28, 0
        // Predicated region
        $region45: #{tpu_custom_call.1} parent=31 // pred_check
          %p275 = pneg %p274
        $region46: #{tpu_custom_call.1} parent=31 // pred_check_branch
          %277 = sbr.rel (%p275) target = $region48
        $region47: #{tpu_custom_call.1} parent=31 // pred_region
          %278 = vst [vmem:[%s270] sm:$0xff] 0.0
          %279 = vst [vmem:[%s270 + $0x8] sm:$0xff] 0.0
        $region48: #{tpu_custom_call.1} parent=31 // pred_fallthru
          _
        %v280 = vld [vmem:[%s220] sm:$0xff]
        %s281 = smul.u32 %s28, 128
        %v282 = vstv %s281
        %v283 = vsub.s32 %v280, %v282
        %v284 = vld [vmem:[%s229] sm:$0xff]
        %v285 = vlaneseq
        %v286 = vshrl.u32 %v285, 7
        %v287 = vadd.s32 %v286, 8
        %v288 = vadd.s32 %v286, 16
        %v289 = vadd.s32 %v286, 24
        %v290 = vadd.s32 %v286, 32
        %v291 = vadd.s32 %v286, 40
        %v292 = vadd.s32 %v286, 48
        %v293 = vadd.s32 %v286, 56
        %v294 = vadd.s32 %v286, 64
        %v295 = vadd.s32 %v286, 72
        %v296 = vadd.s32 %v286, 80
        %v297 = vadd.s32 %v286, 88
        %v298 = vadd.s32 %v286, 96
        %v299 = vadd.s32 %v286, 104
        %v300 = vadd.s32 %v286, 112
        %v301 = vadd.s32 %v286, 120
        %v302 = vlaneseq
        %v303 = vshrl.u32 %v302, 7
        %v304 = vsub.s32 0, %v303
        %v305 = vrot.slane %v283, %v304
        %v306 = vlaneseq
        %v307 = vshrl.u32 %v306, 7
        %v308 = vsub.s32 4, %v307
        %v309 = vrot.slane %v283, %v308
        %v310 = vlaneseq
        %v311 = vshrl.u32 %v310, 7
        %v312 = vsub.s32 0, %v311
        %v313 = vrot.slane %v305, %v312
        %v314 = vlaneseq
        %v315 = vshrl.u32 %v314, 7
        %v316 = vsub.s32 0, %v315
        %v317 = vrot.slane %v309, %v316
        %vm318 = vcmp.eq.s32.totalorder %v286, %v313
        %vm319 = vcmp.eq.s32.totalorder %v286, %v317
        %vm320 = vcmp.eq.s32.totalorder %v287, %v313
        %vm321 = vcmp.eq.s32.totalorder %v287, %v317
        %vm322 = vcmp.eq.s32.totalorder %v288, %v313
        %vm323 = vcmp.eq.s32.totalorder %v288, %v317
        %vm324 = vcmp.eq.s32.totalorder %v289, %v313
        %vm325 = vcmp.eq.s32.totalorder %v289, %v317
        %vm326 = vcmp.eq.s32.totalorder %v290, %v313
        %vm327 = vcmp.eq.s32.totalorder %v290, %v317
        %vm328 = vcmp.eq.s32.totalorder %v291, %v313
        %vm329 = vcmp.eq.s32.totalorder %v291, %v317
        %vm330 = vcmp.eq.s32.totalorder %v292, %v313
        %vm331 = vcmp.eq.s32.totalorder %v292, %v317
        %vm332 = vcmp.eq.s32.totalorder %v293, %v313
        %vm333 = vcmp.eq.s32.totalorder %v293, %v317
        %vm334 = vcmp.eq.s32.totalorder %v294, %v313
        %vm335 = vcmp.eq.s32.totalorder %v294, %v317
        %vm336 = vcmp.eq.s32.totalorder %v295, %v313
        %vm337 = vcmp.eq.s32.totalorder %v295, %v317
        %vm338 = vcmp.eq.s32.totalorder %v296, %v313
        %vm339 = vcmp.eq.s32.totalorder %v296, %v317
        %vm340 = vcmp.eq.s32.totalorder %v297, %v313
        %vm341 = vcmp.eq.s32.totalorder %v297, %v317
        %vm342 = vcmp.eq.s32.totalorder %v298, %v313
        %vm343 = vcmp.eq.s32.totalorder %v298, %v317
        %vm344 = vcmp.eq.s32.totalorder %v299, %v313
        %vm345 = vcmp.eq.s32.totalorder %v299, %v317
        %vm346 = vcmp.eq.s32.totalorder %v300, %v313
        %vm347 = vcmp.eq.s32.totalorder %v300, %v317
        %vm348 = vcmp.eq.s32.totalorder %v301, %v313
        %vm349 = vcmp.eq.s32.totalorder %v301, %v317
        %v351 = vlaneseq
        %v352 = vshrl.u32 %v351, 7
        %v353 = vsub.s32 0, %v352
        %v354 = vrot.slane %v284, %v353
        %v355 = vlaneseq
        %v356 = vshrl.u32 %v355, 7
        %v357 = vsub.s32 4, %v356
        %v358 = vrot.slane %v284, %v357
        %v361 = vlaneseq
        %v362 = vshrl.u32 %v361, 7
        %v363 = vsub.s32 0, %v362
        %v364 = vrot.slane %v354, %v363
        %v365 = vlaneseq
        %v366 = vshrl.u32 %v365, 7
        %v367 = vsub.s32 0, %v366
        %v368 = vrot.slane %v358, %v367
        %v369 = vsel %vm318, %v364, 0.0
        %v370 = vsel %vm319, %v368, 0.0
        %v371 = vsel %vm320, %v364, 0.0
        %v372 = vsel %vm321, %v368, 0.0
        %v373 = vsel %vm322, %v364, 0.0
        %v374 = vsel %vm323, %v368, 0.0
        %v375 = vsel %vm324, %v364, 0.0
        %v376 = vsel %vm325, %v368, 0.0
        %v377 = vsel %vm326, %v364, 0.0
        %v378 = vsel %vm327, %v368, 0.0
        %v379 = vsel %vm328, %v364, 0.0
        %v380 = vsel %vm329, %v368, 0.0
        %v381 = vsel %vm330, %v364, 0.0
        %v382 = vsel %vm331, %v368, 0.0
        %v383 = vsel %vm332, %v364, 0.0
        %v384 = vsel %vm333, %v368, 0.0
        %v385 = vsel %vm334, %v364, 0.0
        %v386 = vsel %vm335, %v368, 0.0
        %v387 = vsel %vm336, %v364, 0.0
        %v388 = vsel %vm337, %v368, 0.0
        %v389 = vsel %vm338, %v364, 0.0
        %v390 = vsel %vm339, %v368, 0.0
        %v391 = vsel %vm340, %v364, 0.0
        %v392 = vsel %vm341, %v368, 0.0
        %v393 = vsel %vm342, %v364, 0.0
        %v394 = vsel %vm343, %v368, 0.0
        %v395 = vsel %vm344, %v364, 0.0
        %v396 = vsel %vm345, %v368, 0.0
        %v397 = vsel %vm346, %v364, 0.0
        %v398 = vsel %vm347, %v368, 0.0
        %v399 = vsel %vm348, %v364, 0.0
        %v400 = vsel %vm349, %v368, 0.0
        %v401 = vlaneseq
        %v402 = vshrl.u32 %v401, 7
        %v403 = vsub.s32 1, %v402
        %v404 = vrot.slane %v283, %v403
        %v405 = vlaneseq
        %v406 = vshrl.u32 %v405, 7
        %v407 = vsub.s32 5, %v406
        %v408 = vrot.slane %v283, %v407
        %v409 = vlaneseq
        %v410 = vshrl.u32 %v409, 7
        %v411 = vsub.s32 1, %v410
        %v412 = vrot.slane %v404, %v411
        %v413 = vlaneseq
        %v414 = vshrl.u32 %v413, 7
        %v415 = vsub.s32 1, %v414
        %v416 = vrot.slane %v408, %v415
        %vm417 = vcmp.eq.s32.totalorder %v286, %v412
        %vm418 = vcmp.eq.s32.totalorder %v286, %v416
        %vm419 = vcmp.eq.s32.totalorder %v287, %v412
        %vm420 = vcmp.eq.s32.totalorder %v287, %v416
        %vm421 = vcmp.eq.s32.totalorder %v288, %v412
        %vm422 = vcmp.eq.s32.totalorder %v288, %v416
        %vm423 = vcmp.eq.s32.totalorder %v289, %v412
        %vm424 = vcmp.eq.s32.totalorder %v289, %v416
        %vm425 = vcmp.eq.s32.totalorder %v290, %v412
        %vm426 = vcmp.eq.s32.totalorder %v290, %v416
        %vm427 = vcmp.eq.s32.totalorder %v291, %v412
        %vm428 = vcmp.eq.s32.totalorder %v291, %v416
        %vm429 = vcmp.eq.s32.totalorder %v292, %v412
        %vm430 = vcmp.eq.s32.totalorder %v292, %v416
        %vm431 = vcmp.eq.s32.totalorder %v293, %v412
        %vm432 = vcmp.eq.s32.totalorder %v293, %v416
        %vm433 = vcmp.eq.s32.totalorder %v294, %v412
        %vm434 = vcmp.eq.s32.totalorder %v294, %v416
        %vm435 = vcmp.eq.s32.totalorder %v295, %v412
        %vm436 = vcmp.eq.s32.totalorder %v295, %v416
        %vm437 = vcmp.eq.s32.totalorder %v296, %v412
        %vm438 = vcmp.eq.s32.totalorder %v296, %v416
        %vm439 = vcmp.eq.s32.totalorder %v297, %v412
        %vm440 = vcmp.eq.s32.totalorder %v297, %v416
        %vm441 = vcmp.eq.s32.totalorder %v298, %v412
        %vm442 = vcmp.eq.s32.totalorder %v298, %v416
        %vm443 = vcmp.eq.s32.totalorder %v299, %v412
        %vm444 = vcmp.eq.s32.totalorder %v299, %v416
        %vm445 = vcmp.eq.s32.totalorder %v300, %v412
        %vm446 = vcmp.eq.s32.totalorder %v300, %v416
        %vm447 = vcmp.eq.s32.totalorder %v301, %v412
        %vm448 = vcmp.eq.s32.totalorder %v301, %v416
        %v449 = vlaneseq
        %v450 = vshrl.u32 %v449, 7
        %v451 = vsub.s32 1, %v450
        %v452 = vrot.slane %v284, %v451
        %v453 = vlaneseq
        %v454 = vshrl.u32 %v453, 7
        %v455 = vsub.s32 5, %v454
        %v456 = vrot.slane %v284, %v455
        %v459 = vlaneseq
        %v460 = vshrl.u32 %v459, 7
        %v461 = vsub.s32 1, %v460
        %v462 = vrot.slane %v452, %v461
        %v463 = vlaneseq
        %v464 = vshrl.u32 %v463, 7
        %v465 = vsub.s32 1, %v464
        %v466 = vrot.slane %v456, %v465
        %v467 = vsel %vm417, %v462, 0.0
        %v468 = vsel %vm418, %v466, 0.0
        %v469 = vsel %vm419, %v462, 0.0
        %v470 = vsel %vm420, %v466, 0.0
        %v471 = vsel %vm421, %v462, 0.0
        %v472 = vsel %vm422, %v466, 0.0
        %v473 = vsel %vm423, %v462, 0.0
        %v474 = vsel %vm424, %v466, 0.0
        %v475 = vsel %vm425, %v462, 0.0
        %v476 = vsel %vm426, %v466, 0.0
        %v477 = vsel %vm427, %v462, 0.0
        %v478 = vsel %vm428, %v466, 0.0
        %v479 = vsel %vm429, %v462, 0.0
        %v480 = vsel %vm430, %v466, 0.0
        %v481 = vsel %vm431, %v462, 0.0
        %v482 = vsel %vm432, %v466, 0.0
        %v483 = vsel %vm433, %v462, 0.0
        %v484 = vsel %vm434, %v466, 0.0
        %v485 = vsel %vm435, %v462, 0.0
        %v486 = vsel %vm436, %v466, 0.0
        %v487 = vsel %vm437, %v462, 0.0
        %v488 = vsel %vm438, %v466, 0.0
        %v489 = vsel %vm439, %v462, 0.0
        %v490 = vsel %vm440, %v466, 0.0
        %v491 = vsel %vm441, %v462, 0.0
        %v492 = vsel %vm442, %v466, 0.0
        %v493 = vsel %vm443, %v462, 0.0
        %v494 = vsel %vm444, %v466, 0.0
        %v495 = vsel %vm445, %v462, 0.0
        %v496 = vsel %vm446, %v466, 0.0
        %v497 = vsel %vm447, %v462, 0.0
        %v498 = vsel %vm448, %v466, 0.0
        %v499 = vadd.f32 %v369, %v467
        %v500 = vadd.f32 %v370, %v468
        %v501 = vadd.f32 %v371, %v469
        %v502 = vadd.f32 %v372, %v470
        %v503 = vadd.f32 %v373, %v471
        %v504 = vadd.f32 %v374, %v472
        %v505 = vadd.f32 %v375, %v473
        %v506 = vadd.f32 %v376, %v474
        %v507 = vadd.f32 %v377, %v475
        %v508 = vadd.f32 %v378, %v476
        %v509 = vadd.f32 %v379, %v477
        %v510 = vadd.f32 %v380, %v478
        %v511 = vadd.f32 %v381, %v479
        %v512 = vadd.f32 %v382, %v480
        %v513 = vadd.f32 %v383, %v481
        %v514 = vadd.f32 %v384, %v482
        %v515 = vadd.f32 %v385, %v483
        %v516 = vadd.f32 %v386, %v484
        %v517 = vadd.f32 %v387, %v485
        %v518 = vadd.f32 %v388, %v486
        %v519 = vadd.f32 %v389, %v487
        %v520 = vadd.f32 %v390, %v488
        %v521 = vadd.f32 %v391, %v489
        %v522 = vadd.f32 %v392, %v490
        %v523 = vadd.f32 %v393, %v491
        %v524 = vadd.f32 %v394, %v492
        %v525 = vadd.f32 %v395, %v493
        %v526 = vadd.f32 %v396, %v494
        %v527 = vadd.f32 %v397, %v495
        %v528 = vadd.f32 %v398, %v496
        %v529 = vadd.f32 %v399, %v497
        %v530 = vadd.f32 %v400, %v498
        %v531 = vlaneseq
        %v532 = vshrl.u32 %v531, 7
        %v533 = vsub.s32 2, %v532
        %v534 = vrot.slane %v283, %v533
        %v535 = vlaneseq
        %v536 = vshrl.u32 %v535, 7
        %v537 = vsub.s32 6, %v536
        %v538 = vrot.slane %v283, %v537
        %v539 = vlaneseq
        %v540 = vshrl.u32 %v539, 7
        %v541 = vsub.s32 2, %v540
        %v542 = vrot.slane %v534, %v541
        %v543 = vlaneseq
        %v544 = vshrl.u32 %v543, 7
        %v545 = vsub.s32 2, %v544
        %v546 = vrot.slane %v538, %v545
        %vm547 = vcmp.eq.s32.totalorder %v286, %v542
        %vm548 = vcmp.eq.s32.totalorder %v286, %v546
        %vm549 = vcmp.eq.s32.totalorder %v287, %v542
        %vm550 = vcmp.eq.s32.totalorder %v287, %v546
        %vm551 = vcmp.eq.s32.totalorder %v288, %v542
        %vm552 = vcmp.eq.s32.totalorder %v288, %v546
        %vm553 = vcmp.eq.s32.totalorder %v289, %v542
        %vm554 = vcmp.eq.s32.totalorder %v289, %v546
        %vm555 = vcmp.eq.s32.totalorder %v290, %v542
        %vm556 = vcmp.eq.s32.totalorder %v290, %v546
        %vm557 = vcmp.eq.s32.totalorder %v291, %v542
        %vm558 = vcmp.eq.s32.totalorder %v291, %v546
        %vm559 = vcmp.eq.s32.totalorder %v292, %v542
        %vm560 = vcmp.eq.s32.totalorder %v292, %v546
        %vm561 = vcmp.eq.s32.totalorder %v293, %v542
        %vm562 = vcmp.eq.s32.totalorder %v293, %v546
        %vm563 = vcmp.eq.s32.totalorder %v294, %v542
        %vm564 = vcmp.eq.s32.totalorder %v294, %v546
        %vm565 = vcmp.eq.s32.totalorder %v295, %v542
        %vm566 = vcmp.eq.s32.totalorder %v295, %v546
        %vm567 = vcmp.eq.s32.totalorder %v296, %v542
        %vm568 = vcmp.eq.s32.totalorder %v296, %v546
        %vm569 = vcmp.eq.s32.totalorder %v297, %v542
        %vm570 = vcmp.eq.s32.totalorder %v297, %v546
        %vm571 = vcmp.eq.s32.totalorder %v298, %v542
        %vm572 = vcmp.eq.s32.totalorder %v298, %v546
        %vm573 = vcmp.eq.s32.totalorder %v299, %v542
        %vm574 = vcmp.eq.s32.totalorder %v299, %v546
        %vm575 = vcmp.eq.s32.totalorder %v300, %v542
        %vm576 = vcmp.eq.s32.totalorder %v300, %v546
        %vm577 = vcmp.eq.s32.totalorder %v301, %v542
        %vm578 = vcmp.eq.s32.totalorder %v301, %v546
        %v579 = vlaneseq
        %v580 = vshrl.u32 %v579, 7
        %v581 = vsub.s32 2, %v580
        %v582 = vrot.slane %v284, %v581
        %v583 = vlaneseq
        %v584 = vshrl.u32 %v583, 7
        %v585 = vsub.s32 6, %v584
        %v586 = vrot.slane %v284, %v585
        %v589 = vlaneseq
        %v590 = vshrl.u32 %v589, 7
        %v591 = vsub.s32 2, %v590
        %v592 = vrot.slane %v582, %v591
        %v593 = vlaneseq
        %v594 = vshrl.u32 %v593, 7
        %v595 = vsub.s32 2, %v594
        %v596 = vrot.slane %v586, %v595
        %v597 = vsel %vm547, %v592, 0.0
        %v598 = vsel %vm548, %v596, 0.0
        %v599 = vsel %vm549, %v592, 0.0
        %v600 = vsel %vm550, %v596, 0.0
        %v601 = vsel %vm551, %v592, 0.0
        %v602 = vsel %vm552, %v596, 0.0
        %v603 = vsel %vm553, %v592, 0.0
        %v604 = vsel %vm554, %v596, 0.0
        %v605 = vsel %vm555, %v592, 0.0
        %v606 = vsel %vm556, %v596, 0.0
        %v607 = vsel %vm557, %v592, 0.0
        %v608 = vsel %vm558, %v596, 0.0
        %v609 = vsel %vm559, %v592, 0.0
        %v610 = vsel %vm560, %v596, 0.0
        %v611 = vsel %vm561, %v592, 0.0
        %v612 = vsel %vm562, %v596, 0.0
        %v613 = vsel %vm563, %v592, 0.0
        %v614 = vsel %vm564, %v596, 0.0
        %v615 = vsel %vm565, %v592, 0.0
        %v616 = vsel %vm566, %v596, 0.0
        %v617 = vsel %vm567, %v592, 0.0
        %v618 = vsel %vm568, %v596, 0.0
        %v619 = vsel %vm569, %v592, 0.0
        %v620 = vsel %vm570, %v596, 0.0
        %v621 = vsel %vm571, %v592, 0.0
        %v622 = vsel %vm572, %v596, 0.0
        %v623 = vsel %vm573, %v592, 0.0
        %v624 = vsel %vm574, %v596, 0.0
        %v625 = vsel %vm575, %v592, 0.0
        %v626 = vsel %vm576, %v596, 0.0
        %v627 = vsel %vm577, %v592, 0.0
        %v628 = vsel %vm578, %v596, 0.0
        %v629 = vadd.f32 %v499, %v597
        %v630 = vadd.f32 %v500, %v598
        %v631 = vadd.f32 %v501, %v599
        %v632 = vadd.f32 %v502, %v600
        %v633 = vadd.f32 %v503, %v601
        %v634 = vadd.f32 %v504, %v602
        %v635 = vadd.f32 %v505, %v603
        %v636 = vadd.f32 %v506, %v604
        %v637 = vadd.f32 %v507, %v605
        %v638 = vadd.f32 %v508, %v606
        %v639 = vadd.f32 %v509, %v607
        %v640 = vadd.f32 %v510, %v608
        %v641 = vadd.f32 %v511, %v609
        %v642 = vadd.f32 %v512, %v610
        %v643 = vadd.f32 %v513, %v611
        %v644 = vadd.f32 %v514, %v612
        %v645 = vadd.f32 %v515, %v613
        %v646 = vadd.f32 %v516, %v614
        %v647 = vadd.f32 %v517, %v615
        %v648 = vadd.f32 %v518, %v616
        %v649 = vadd.f32 %v519, %v617
        %v650 = vadd.f32 %v520, %v618
        %v651 = vadd.f32 %v521, %v619
        %v652 = vadd.f32 %v522, %v620
        %v653 = vadd.f32 %v523, %v621
        %v654 = vadd.f32 %v524, %v622
        %v655 = vadd.f32 %v525, %v623
        %v656 = vadd.f32 %v526, %v624
        %v657 = vadd.f32 %v527, %v625
        %v658 = vadd.f32 %v528, %v626
        %v659 = vadd.f32 %v529, %v627
        %v660 = vadd.f32 %v530, %v628
        %v661 = vlaneseq
        %v662 = vshrl.u32 %v661, 7
        %v663 = vsub.s32 3, %v662
        %v664 = vrot.slane %v283, %v663
        %v665 = vlaneseq
        %v666 = vshrl.u32 %v665, 7
        %v667 = vsub.s32 7, %v666
        %v668 = vrot.slane %v283, %v667
        %v669 = vlaneseq
        %v670 = vshrl.u32 %v669, 7
        %v671 = vsub.s32 3, %v670
        %v672 = vrot.slane %v664, %v671
        %v673 = vlaneseq
        %v674 = vshrl.u32 %v673, 7
        %v675 = vsub.s32 3, %v674
        %v676 = vrot.slane %v668, %v675
        %vm677 = vcmp.eq.s32.totalorder %v286, %v672
        %vm678 = vcmp.eq.s32.totalorder %v286, %v676
        %vm679 = vcmp.eq.s32.totalorder %v287, %v672
        %vm680 = vcmp.eq.s32.totalorder %v287, %v676
        %vm681 = vcmp.eq.s32.totalorder %v288, %v672
        %vm682 = vcmp.eq.s32.totalorder %v288, %v676
        %vm683 = vcmp.eq.s32.totalorder %v289, %v672
        %vm684 = vcmp.eq.s32.totalorder %v289, %v676
        %vm685 = vcmp.eq.s32.totalorder %v290, %v672
        %vm686 = vcmp.eq.s32.totalorder %v290, %v676
        %vm687 = vcmp.eq.s32.totalorder %v291, %v672
        %vm688 = vcmp.eq.s32.totalorder %v291, %v676
        %vm689 = vcmp.eq.s32.totalorder %v292, %v672
        %vm690 = vcmp.eq.s32.totalorder %v292, %v676
        %vm691 = vcmp.eq.s32.totalorder %v293, %v672
        %vm692 = vcmp.eq.s32.totalorder %v293, %v676
        %vm693 = vcmp.eq.s32.totalorder %v294, %v672
        %vm694 = vcmp.eq.s32.totalorder %v294, %v676
        %vm695 = vcmp.eq.s32.totalorder %v295, %v672
        %vm696 = vcmp.eq.s32.totalorder %v295, %v676
        %vm697 = vcmp.eq.s32.totalorder %v296, %v672
        %vm698 = vcmp.eq.s32.totalorder %v296, %v676
        %vm699 = vcmp.eq.s32.totalorder %v297, %v672
        %vm700 = vcmp.eq.s32.totalorder %v297, %v676
        %vm701 = vcmp.eq.s32.totalorder %v298, %v672
        %vm702 = vcmp.eq.s32.totalorder %v298, %v676
        %vm703 = vcmp.eq.s32.totalorder %v299, %v672
        %vm704 = vcmp.eq.s32.totalorder %v299, %v676
        %vm705 = vcmp.eq.s32.totalorder %v300, %v672
        %vm706 = vcmp.eq.s32.totalorder %v300, %v676
        %vm707 = vcmp.eq.s32.totalorder %v301, %v672
        %vm708 = vcmp.eq.s32.totalorder %v301, %v676
        %v709 = vlaneseq
        %v710 = vshrl.u32 %v709, 7
        %v711 = vsub.s32 3, %v710
        %v712 = vrot.slane %v284, %v711
        %v713 = vlaneseq
        %v714 = vshrl.u32 %v713, 7
        %v715 = vsub.s32 7, %v714
        %v716 = vrot.slane %v284, %v715
        %v719 = vlaneseq
        %v720 = vshrl.u32 %v719, 7
        %v721 = vsub.s32 3, %v720
        %v722 = vrot.slane %v712, %v721
        %v723 = vlaneseq
        %v724 = vshrl.u32 %v723, 7
        %v725 = vsub.s32 3, %v724
        %v726 = vrot.slane %v716, %v725
        %v727 = vsel %vm677, %v722, 0.0
        %v728 = vsel %vm678, %v726, 0.0
        %v729 = vsel %vm679, %v722, 0.0
        %v730 = vsel %vm680, %v726, 0.0
        %v731 = vsel %vm681, %v722, 0.0
        %v732 = vsel %vm682, %v726, 0.0
        %v733 = vsel %vm683, %v722, 0.0
        %v734 = vsel %vm684, %v726, 0.0
        %v735 = vsel %vm685, %v722, 0.0
        %v736 = vsel %vm686, %v726, 0.0
        %v737 = vsel %vm687, %v722, 0.0
        %v738 = vsel %vm688, %v726, 0.0
        %v739 = vsel %vm689, %v722, 0.0
        %v740 = vsel %vm690, %v726, 0.0
        %v741 = vsel %vm691, %v722, 0.0
        %v742 = vsel %vm692, %v726, 0.0
        %v743 = vsel %vm693, %v722, 0.0
        %v744 = vsel %vm694, %v726, 0.0
        %v745 = vsel %vm695, %v722, 0.0
        %v746 = vsel %vm696, %v726, 0.0
        %v747 = vsel %vm697, %v722, 0.0
        %v748 = vsel %vm698, %v726, 0.0
        %v749 = vsel %vm699, %v722, 0.0
        %v750 = vsel %vm700, %v726, 0.0
        %v751 = vsel %vm701, %v722, 0.0
        %v752 = vsel %vm702, %v726, 0.0
        %v753 = vsel %vm703, %v722, 0.0
        %v754 = vsel %vm704, %v726, 0.0
        %v755 = vsel %vm705, %v722, 0.0
        %v756 = vsel %vm706, %v726, 0.0
        %v757 = vsel %vm707, %v722, 0.0
        %v758 = vsel %vm708, %v726, 0.0
        %v759 = vadd.f32 %v629, %v727
        %v760 = vadd.f32 %v630, %v728
        %v761 = vadd.f32 %v631, %v729
        %v762 = vadd.f32 %v632, %v730
        %v763 = vadd.f32 %v633, %v731
        %v764 = vadd.f32 %v634, %v732
        %v765 = vadd.f32 %v635, %v733
        %v766 = vadd.f32 %v636, %v734
        %v767 = vadd.f32 %v637, %v735
        %v768 = vadd.f32 %v638, %v736
        %v769 = vadd.f32 %v639, %v737
        %v770 = vadd.f32 %v640, %v738
        %v771 = vadd.f32 %v641, %v739
        %v772 = vadd.f32 %v642, %v740
        %v773 = vadd.f32 %v643, %v741
        %v774 = vadd.f32 %v644, %v742
        %v775 = vadd.f32 %v645, %v743
        %v776 = vadd.f32 %v646, %v744
        %v777 = vadd.f32 %v647, %v745
        %v778 = vadd.f32 %v648, %v746
        %v779 = vadd.f32 %v649, %v747
        %v780 = vadd.f32 %v650, %v748
        %v781 = vadd.f32 %v651, %v749
        %v782 = vadd.f32 %v652, %v750
        %v783 = vadd.f32 %v653, %v751
        %v784 = vadd.f32 %v654, %v752
        %v785 = vadd.f32 %v655, %v753
        %v786 = vadd.f32 %v656, %v754
        %v787 = vadd.f32 %v657, %v755
        %v788 = vadd.f32 %v658, %v756
        %v789 = vadd.f32 %v659, %v757
        %v790 = vadd.f32 %v660, %v758
        %v791 = vld [vmem:[%s270] sm:$0xff]
        %v792 = vld [vmem:[%s270 + $0x8] sm:$0xff]
        %v793 = vld [vmem:[%s238] sm:$0xff]
        %794 = vmatprep.subr.mxu0 %v790
        %795 = vmatpush1.msra.mxu0 %v789
        %796 = vmatprep.subr.mxu0 %v788
        %797 = vmatpush1.msra.mxu0 %v787
        %798 = vmatprep.subr.mxu0 %v786
        %799 = vmatpush1.msra.mxu0 %v785
        %800 = vmatprep.subr.mxu0 %v784
        %801 = vmatpush1.msra.mxu0 %v783
        %802 = vmatprep.subr.mxu0 %v782
        %803 = vmatpush1.msra.mxu0 %v781
        %804 = vmatprep.subr.mxu0 %v780
        %805 = vmatpush1.msra.mxu0 %v779
        %806 = vmatprep.subr.mxu0 %v778
        %807 = vmatpush1.msra.mxu0 %v777
        %808 = vmatprep.subr.mxu0 %v776
        %809 = vmatpush1.msra.mxu0 %v775
        %810 = vmatprep.subr.mxu0 %v774
        %811 = vmatpush1.msra.mxu0 %v773
        %812 = vmatprep.subr.mxu0 %v772
        %813 = vmatpush1.msra.mxu0 %v771
        %814 = vmatprep.subr.mxu0 %v770
        %815 = vmatpush1.msra.mxu0 %v769
        %816 = vmatprep.subr.mxu0 %v768
        %817 = vmatpush1.msra.mxu0 %v767
        %818 = vmatprep.subr.mxu0 %v766
        %819 = vmatpush1.msra.mxu0 %v765
        %820 = vmatprep.subr.mxu0 %v764
        %821 = vmatpush1.msra.mxu0 %v763
        %822 = vmatprep.subr.mxu0 %v762
        %823 = vmatpush1.msra.mxu0 %v761
        %824 = vmatprep.subr.mxu0 %v760
        %825 = vmatpush1.msra.mxu0 %v759
        %826 = vmatprep.subr.mxu0 0.0
        %827 = vmatpush2.msra.mxu0 0.0
        %828 = vmatprep.subr.mxu0 0.0
        %829 = vmatpush2.msra.mxu0 0.0
        %830 = vmatprep.subr.mxu0 0.0
        %831 = vmatpush2.msra.mxu0 0.0
        %832 = vmatprep.subr.mxu0 0.0
        %833 = vmatpush2.msra.mxu0 0.0
        %834 = vmatprep.subr.mxu0 0.0
        %835 = vmatpush2.msra.mxu0 0.0
        %836 = vmatprep.subr.mxu0 0.0
        %837 = vmatpush2.msra.mxu0 0.0
        %838 = vmatprep.subr.mxu0 0.0
        %839 = vmatpush2.msra.mxu0 0.0
        %840 = vmatprep.subr.mxu0 0.0
        %841 = vmatpush2.msra.mxu0 0.0
        %842 = vmatprep.subr.mxu0 0.0
        %843 = vmatpush2.msra.mxu0 0.0
        %844 = vmatprep.subr.mxu0 0.0
        %845 = vmatpush2.msra.mxu0 0.0
        %846 = vmatprep.subr.mxu0 0.0
        %847 = vmatpush2.msra.mxu0 0.0
        %848 = vmatprep.subr.mxu0 0.0
        %849 = vmatpush2.msra.mxu0 0.0
        %850 = vmatprep.subr.mxu0 0.0
        %851 = vmatpush2.msra.mxu0 0.0
        %852 = vmatprep.subr.mxu0 0.0
        %853 = vmatpush2.msra.mxu0 0.0
        %854 = vmatprep.subr.mxu0 0.0
        %855 = vmatpush2.msra.mxu0 0.0
        %856 = vmatprep.subr.mxu0 0.0
        %857 = vmatpush2.msra.mxu0 0.0
        %858 = vmatprep.mubr.f32.mxu0 0.0
        %859 = vmatmul.mubr.f32.gmra.mxu0 %v793
        %v860 = vpop.f32.mrf.mxu0
        %v861 = vadd.f32 0.0, %v860
        %v862 = vpop.f32.mrf.mxu0
        %v863 = vadd.f32 0.0, %v862
        %864 = vdwg.mxu0
        %v865 = vadd.f32 %v791, %v861
        %v866 = vadd.f32 %v792, %v863
        %867 = vst [vmem:[%s270] sm:$0xff] %v865
        %868 = vst [vmem:[%s270 + $0x8] sm:$0xff] %v866
        %s869 = sand.u32 %s121, 1
        %s870 = scalar_lea.sflag [#allocation4], %s869
        %s871 = sand.u32 %s121, 1
        %s872 = smul.addr %s871, 16
        %s873 = scalar_lea.vmem [#allocation8], %s872
        // Predicated region
        $region49: #{tpu_custom_call.1} parent=31 // pred_check
          %p874 = pneg %p131
        $region50: #{tpu_custom_call.1} parent=31 // pred_check_branch
          %876 = sbr.rel (%p874) target = $region52
        $region51: #{tpu_custom_call.1} parent=31 // pred_region
          %s877 = smul.u32 2, %s27
          %s879 = ssub.s32 256, 256
          %880 = vsyncadd %s870, %s879
          %s881 = smul.addr %s877, 128
          %s882 = scalar_lea.hbm %s3, %s881
          %s884 = sshll.u32 %s873, 4
          %s885 = int_to_ptr.vmem [resolvable:$true] %s884
          %887 = dma.vmem_to_hbm [thread:$0]  %s885, 256, %s882, %s870
        $region52: #{tpu_custom_call.1} parent=31 // pred_fallthru
          _
      $region32: #{tpu_custom_call.1} parent=5 // pred_fallthru
        _
      %p888 = scmp.le.s32.totalorder 2, %s18
      // Predicated region
      $region53: #{tpu_custom_call.1} parent=5 // pred_check
        %p889 = pneg %p888
      $region54: #{tpu_custom_call.1} parent=5 // pred_check_branch
        %891 = sbr.rel (%p889) target = $region56
      $region55: #{tpu_custom_call.1} parent=5 // pred_region
        %s892 = ssub.s32 %s18, 2
        // Predicated region
        $region57: #{tpu_custom_call.1} parent=55 // pred_check
          %p893 = pneg %p137
        $region58: #{tpu_custom_call.1} parent=55 // pred_check_branch
          %895 = sbr.rel (%p893) target = $region60
        $region59: #{tpu_custom_call.1} parent=55 // pred_region
          %s896 = sand.u32 %s122, 1
          %s897 = scalar_lea.sflag [#allocation4], %s896
          %s898 = sand.u32 %s122, 1
          %s899 = smul.addr %s898, 16
          %s900 = scalar_lea.vmem [#allocation8], %s899
          %901 = dma.done %s897, 256
        $region60: #{tpu_custom_call.1} parent=55 // pred_fallthru
          _
      $region56: #{tpu_custom_call.1} parent=5 // pred_fallthru
        _
    $region6: #{tpu_custom_call.1} parent=1 // loop_footer
      %s22 = sadd.s32 1, %s18
    $region7: #{tpu_custom_call.1} parent=1 // loop_footer_branch
      %17 = sbr.rel target = $region3
    $region8: #{tpu_custom_call.1} parent=1 // loop_exit
      _
    %902 = vsyncpa [#allocation3], 1
    %s903 = scalar_lea.sflag [#allocation3], 1
    %904 = vsyncpa %s903, 1
    %905 = vsyncpa [#allocation6], 1
    %s906 = scalar_lea.sflag [#allocation6], 1
    %907 = vsyncpa %s906, 1
    %908 = vsyncpa [#allocation4], 1
    %s909 = scalar_lea.sflag [#allocation4], 1
    %910 = vsyncpa %s909, 1

</llo_original>
